<compile_context>
chip_gen: v5e
topology: v5e:2x2
jax: 0.10.0
libtpu: 0.0.40
codegen_flags: <defaults>
</compile_context>

<pallas_src>
import jax
import jax.numpy as jnp
from jax.experimental import pallas as pl
from jax.experimental.pallas import tpu as pltpu


def _identity_kernel(x_ref, o_ref):
    # Hot path: whole-block VMEM copy (elementwise identity).
    o_ref[...] = x_ref[...]


# Target payload bytes per block. With double-buffered input + output this is
# ~4x resident in VMEM, safe on every TPU generation's scoped-VMEM default.
_TARGET_BLOCK_BYTES = 2 * 1024 * 1024


def identity(x: jax.Array, *, donate_input: bool = False) -> jax.Array:
    """Pallas identity: y = x, exact shape/dtype passthrough."""
    if x.size == 0:
        return x  # nothing to copy

    orig_shape = x.shape
    n = x.size
    itemsize = jnp.dtype(x.dtype).itemsize
    # Sublane packing requirement: 8 rows for 4-byte dtypes, 16 for 2-byte
    # (bf16), 32 for 1-byte (int8 / fp8).
    sub = max(8, 32 // max(itemsize, 1))
    target_elems = max(_TARGET_BLOCK_BYTES // itemsize, 8 * 128)

    if n % 128 == 0:
        # Fast path: zero-copy reshape to a lane-dense (rows, lane) slab.
        lane = 128
        for w in (2048, 1024, 512, 256):
            if n % w == 0:
                lane = w
                break
        rows = n // lane
        x2d = x.reshape(rows, lane)

        # ~2 MiB of payload per block, rows a multiple of the packed sublane
        # requirement; grid handles the (possibly partial) boundary block.
        tile_rows = (target_elems // lane) // sub * sub
        tile_rows = max(sub, min(tile_rows, rows))
        if tile_rows >= rows:
            tile_rows = rows  # single full-extent block (always legal)
        block = (tile_rows, lane)
        grid = (pl.cdiv(rows, tile_rows),)
        index_map = lambda i: (i, 0)
    else:
        # Ragged size (n not a multiple of 128): view the flat array as (1, n)
        # and tile the lane dimension; Pallas masks the partial boundary
        # block, so there is still no padding and no post-kernel slice.
        x2d = x.reshape(1, n)
        # A (1, L) block pads to 8 sublanes in VMEM, so keep L modest.
        lane_cap = max(128, (target_elems // 8) // 128 * 128)
        block_lane = min(lane_cap, pl.cdiv(n, 128) * 128)
        block = (1, block_lane)
        grid = (pl.cdiv(n, block_lane),)
        index_map = lambda i: (0, i)

    y2d = pl.pallas_call(
        _identity_kernel,
        out_shape=jax.ShapeDtypeStruct(x2d.shape, x2d.dtype),
        grid_spec=pltpu.PrefetchScalarGridSpec(
            num_scalar_prefetch=0,
            grid=grid,
            in_specs=[pl.BlockSpec(block, index_map)],
            out_specs=pl.BlockSpec(block, index_map),
        ),
        compiler_params=pltpu.CompilerParams(
            dimension_semantics=("parallel",),
        ),
        # Pure-bandwidth hint for XLA's scheduler: read + write of the tensor.
        cost_estimate=pl.CostEstimate(
            flops=0, transcendentals=0, bytes_accessed=2 * x2d.nbytes
        ),
        # When the caller donates x (dead after this call), alias the input to
        # the output so no second full-size HBM buffer is allocated/written.
        input_output_aliases={0: 0} if donate_input else {},
    )(x2d)

    return y2d.reshape(orig_shape)


if __name__ == "__main__":
    key = jax.random.PRNGKey(0)

    # Shapes consistent with the module's typical NCHW usage.
    x = jax.random.normal(key, (2, 4, 16, 16), dtype=jnp.float32)
    y = identity(x)
    jax.block_until_ready(y)
    assert y.shape == x.shape and y.dtype == x.dtype
    assert bool(jnp.array_equal(y, x))

    # Exercise the ragged (n % 128 != 0) path as well — no padding, no slice.
    x2 = jax.random.normal(jax.random.PRNGKey(1), (3, 5, 7), dtype=jnp.float32)
    y2 = identity(x2)
    jax.block_until_ready(y2)
    assert y2.shape == x2.shape and y2.dtype == x2.dtype
    assert bool(jnp.array_equal(y2, x2))

    print("KERNEL_OK")
</pallas_src>

<mosaic_0001>
module attributes {stable_mosaic.version = 11 : i64} {
  func.func @_identity_kernel(%arg0: i32, %arg1: memref<1x2048xf32, #tpu.memory_space<vmem>>, %arg2: memref<1x2048xf32, #tpu.memory_space<vmem>>) attributes {dimension_semantics = [#tpu.dimension_semantics<parallel>], iteration_bounds = array<i64: 1>, scalar_prefetch = 0 : i64, scratch_operands = 0 : i64, tpu.core_type = #tpu.core_type<tc>, window_params = [{transform_indices = @transform_0, window_bounds = array<i64: 1, 2048>}, {transform_indices = @transform_1, window_bounds = array<i64: 1, 2048>}]} {
    %c0 = arith.constant 0 : index
    %c0_0 = arith.constant 0 : index
    %0 = vector.load %arg1[%c0, %c0_0] : memref<1x2048xf32, #tpu.memory_space<vmem>>, vector<1x2048xf32>
    %c0_1 = arith.constant 0 : index
    %c0_2 = arith.constant 0 : index
    %1 = vector.load %arg2[%c0_1, %c0_2] : memref<1x2048xf32, #tpu.memory_space<vmem>>, vector<1x2048xf32>
    tpu.vector_store %arg2[%c0_1, %c0_2], %0 {strides = array<i32>} : memref<1x2048xf32, #tpu.memory_space<vmem>>, vector<1x2048xf32>,
    return
  }
  func.func @transform_0(%arg0: i32) -> (i32, i32) {
    %c0_i32 = arith.constant 0 : i32
    %c0_i32_0 = arith.constant 0 : i32
    return %arg0, %c0_i32 : i32, i32
  }
  func.func @transform_1(%arg0: i32) -> (i32, i32) {
    %c0_i32 = arith.constant 0 : i32
    %c0_i32_0 = arith.constant 0 : i32
    return %arg0, %c0_i32 : i32, i32
  }
}

</mosaic_0001>

<llo_original>
// kernel: tpu_custom_call.1
$region0: #{tpu_custom_call.1}
  #allocation0 [shape = 'u32[]', space=smem, size = 0x4, offset = 0x4, fixed_abs, tag = 'smem constant byte address 0x4 - core index']
  #allocation1 [shape = 'u32[72,128]{1,0:T(1,128)}', space=vmem, size = 0x9000, scoped, tag = 'internal scratch']
  %s0 = inlined_call_operand.hbm [shape: f32[1,2048], index: 0, kind: input, shape index: {}]
  %s1 = inlined_call_operand.hbm [shape: f32[1,2048], index: 1, kind: output, shape index: {}]
  %s2 = sld [smem:[#allocation0]]
  $region18: #{tpu_custom_call.1} parent=0
    _
  %s4 = ssub.s32 1, %s2
  %s5 = scalar_select 0, %s4, %s2
  $region1: #{tpu_custom_call.1} parent=0
    #allocation2 [shape = 'u8[8192]{0}', space=vmem, size = 0x2000, scoped, tag = 'input window, operand 0, single buffered']
    #allocation3 [shape = 's32[1]{0}', space=sflag, size = 0x4, scoped, tag = 'scoped memory for tpu_custom_call.1']
    #allocation4 [shape = 's32[1]{0}', space=sflag, size = 0x4, scoped, tag = 'scoped memory for tpu_custom_call.1']
    #allocation5 [shape = 'u8[8192]{0}', space=vmem, size = 0x2000, scoped, tag = 'output window, operand 0, single buffered']
    %6 = vsyncpa [#allocation3], 0
    %7 = vsyncpa [#allocation4], 0
    // Predicated region
    $region2: #{tpu_custom_call.1} parent=1 // pred_check
      _
    $region3: #{tpu_custom_call.1} parent=1 // pred_check_branch
      %9 = sbr.rel (0) target = $region5
    $region4: #{tpu_custom_call.1} parent=1 // pred_region
      %11 = vsyncadd [#allocation3], 0
      %s13 = sshll.u32 %s0, 4
      %s14 = int_to_ptr.hbm [resolvable:$true] %s13
      %s15 = sshll.u32 [#allocation2], 4
      %s16 = int_to_ptr.vmem [resolvable:$true] %s15
      %18 = dma.hbm_to_vmem [thread:$0]  %s14, 256, %s16, [#allocation3]
    $region5: #{tpu_custom_call.1} parent=1 // pred_fallthru
      _
    // Predicated region
    $region6: #{tpu_custom_call.1} parent=1 // pred_check
      _
    $region7: #{tpu_custom_call.1} parent=1 // pred_check_branch
      %20 = sbr.rel (0) target = $region9
    $region8: #{tpu_custom_call.1} parent=1 // pred_region
      %22 = dma.done [#allocation3], 256
    $region9: #{tpu_custom_call.1} parent=1 // pred_fallthru
      _
    %v23 = vld [vmem:[#allocation2] sm:$0xff]
    %v24 = vld [vmem:[#allocation2 + $0x8] sm:$0xff]
    %25 = vst [vmem:[#allocation5] sm:$0xff] %v23
    %26 = vst [vmem:[#allocation5 + $0x8] sm:$0xff] %v24
    // Predicated region
    $region10: #{tpu_custom_call.1} parent=1 // pred_check
      _
    $region11: #{tpu_custom_call.1} parent=1 // pred_check_branch
      %28 = sbr.rel (0) target = $region13
    $region12: #{tpu_custom_call.1} parent=1 // pred_region
      %30 = vsyncadd [#allocation4], 0
      %s32 = sshll.u32 [#allocation5], 4
      %s33 = int_to_ptr.vmem [resolvable:$true] %s32
      %s34 = sshll.u32 %s1, 4
      %s35 = int_to_ptr.hbm [resolvable:$true] %s34
      %37 = dma.vmem_to_hbm [thread:$0]  %s33, 256, %s35, [#allocation4]
    $region13: #{tpu_custom_call.1} parent=1 // pred_fallthru
      _
    // Predicated region
    $region14: #{tpu_custom_call.1} parent=1 // pred_check
      _
    $region15: #{tpu_custom_call.1} parent=1 // pred_check_branch
      %39 = sbr.rel (0) target = $region17
    $region16: #{tpu_custom_call.1} parent=1 // pred_region
      %41 = dma.done [#allocation4], 256
    $region17: #{tpu_custom_call.1} parent=1 // pred_fallthru
      _
    %42 = vsyncpa [#allocation3], 1
    %43 = vsyncpa [#allocation4], 1

</llo_original>
